<compile_context>
chip_gen: v6e
topology: v6e:2x2x1
jax: 0.10.0
libtpu: 0.0.40
codegen_flags: <defaults>
</compile_context>

<pallas_src>
import math

import jax
import jax.numpy as jnp
import numpy as np
from jax.experimental import pallas as pl
from jax.experimental.pallas import tpu as pltpu


def _gelu_exact(x):
    # PyTorch nn.GELU() default: exact erf-based GELU (computed in f32).
    return 0.5 * x * (1.0 + jax.lax.erf(x * (1.0 / math.sqrt(2.0))))


def decoder_kernel(x_ref,
                   w1_ref, b1_ref,
                   w2_ref, b2_ref,
                   w3_ref, b3_ref,
                   w4_ref, b4_ref,
                   out_ref):
    # Layer 1: (mean + concat folded into W1) -> single matmul, f32 accumulate.
    h = jnp.dot(x_ref[...], w1_ref[...],
                preferred_element_type=jnp.float32) + b1_ref[...]
    h = _gelu_exact(h)                       # f32 on VPU/EUP (safe on v5e)

    # Layer 2
    h = jnp.dot(h.astype(w2_ref.dtype), w2_ref[...],
                preferred_element_type=jnp.float32) + b2_ref[...]
    h = _gelu_exact(h)

    # Layer 3
    h = jnp.dot(h.astype(w3_ref.dtype), w3_ref[...],
                preferred_element_type=jnp.float32) + b3_ref[...]
    h = _gelu_exact(h)

    # Layer 4 (output projection, padded to a lane-dense O_pad)
    y = jnp.dot(h.astype(w4_ref.dtype), w4_ref[...],
                preferred_element_type=jnp.float32) + b4_ref[...]
    out_ref[...] = y.astype(out_ref.dtype)


def _pick_tile(n, target=1024):
    """Largest divisor of n that is a multiple of 8 and <= target; else n."""
    for tn in range(min(n, target), 7, -1):
        if n % tn == 0 and tn % 8 == 0:
            return tn
    return n


def decoder_forward(triplane_features, gaussian_features, params,
                    *, tile_n=None, use_bf16=False):
    """triplane_features: (P, N, C) f32; gaussian_features: (N, G) f32."""
    P, N, C = triplane_features.shape
    G = gaussian_features.shape[-1]
    w1, b1, w2, b2, w3, b3, w4, b4 = params
    H = w1.shape[1]
    O = w4.shape[1]
    assert w1.shape[0] == C + G

    mm_dtype = jnp.bfloat16 if use_bf16 else jnp.float32

    # --- fold mean + concat into the first matmul ------------------------
    # (P, N, C) -> (N, P*C); concat gaussian -> (N, F) single input slab.
    # W1_folded = [stack([W1a / P] * P); W1b]  so  x_cat @ W1_folded
    #           == concat([mean_p(triplane), gauss], -1) @ W1   exactly.
    F = P * C + G
    tp_flat = jnp.transpose(triplane_features, (1, 0, 2)).reshape(N, P * C)
    x_cat = jnp.concatenate(
        [tp_flat.astype(jnp.float32), gaussian_features.astype(jnp.float32)],
        axis=-1)                                                  # (N, F)
    w1a = w1[:C, :]
    w1b = w1[C:, :]
    w1_folded = jnp.concatenate([w1a / float(P)] * P + [w1b], axis=0)  # (F, H)

    # --- lane-dense output: pad O up to a multiple of 128 -----------------
    O_pad = max(128, ((O + 127) // 128) * 128)
    w4_p = jnp.pad(w4, ((0, 0), (0, O_pad - O)))
    b4_p = jnp.pad(b4, (0, O_pad - O)).reshape(1, O_pad).astype(jnp.float32)

    # biases as (1, H) f32 rows (bias add / GELU stay f32)
    b1_ = b1.reshape(1, H).astype(jnp.float32)
    b2_ = b2.reshape(1, H).astype(jnp.float32)
    b3_ = b3.reshape(1, H).astype(jnp.float32)

    # matmul-operand dtype (inputs + weights); accumulation stays f32.
    x_cat = x_cat.astype(mm_dtype)
    w1_ = w1_folded.astype(mm_dtype)
    w2_ = w2.astype(mm_dtype)
    w3_ = w3.astype(mm_dtype)
    w4_p = w4_p.astype(mm_dtype)

    # --- row tiling: pipelined DMA + both v7x TensorCores ------------------
    tn = _pick_tile(N) if tile_n is None else tile_n
    assert N % tn == 0, "tile_n must divide N"
    assert tn % 8 == 0 or tn == N, "tile_n must be a multiple of 8 (or == N)"
    grid = (N // tn,)

    # --- VMEM budget (double-buffered tiles + resident weights), capped so
    #     it also fits v7x's 64 MiB physical VMEM ---------------------------
    bpe = 2 if use_bf16 else 4
    tile_in_bytes = 2 * tn * F * bpe
    tile_out_bytes = 2 * tn * O_pad * 4
    weight_bytes = (F * H + 2 * H * H + H * O_pad) * bpe
    bias_bytes = (3 * H + O_pad) * 4
    vmem_est = tile_in_bytes + tile_out_bytes + weight_bytes + bias_bytes + (2 << 20)
    vmem_limit = int(min(max(2 * vmem_est, 16 << 20), 48 << 20))

    full2 = lambda r, c: pl.BlockSpec((r, c), lambda i: (0, 0))

    out = pl.pallas_call(
        decoder_kernel,
        out_shape=jax.ShapeDtypeStruct((N, O_pad), jnp.float32),
        grid_spec=pltpu.PrefetchScalarGridSpec(
            num_scalar_prefetch=0,
            grid=grid,
            in_specs=[
                pl.BlockSpec((tn, F), lambda i: (i, 0)),   # fused input slab
                full2(F, H), full2(1, H),                  # layer 1
                full2(H, H), full2(1, H),                  # layer 2
                full2(H, H), full2(1, H),                  # layer 3
                full2(H, O_pad), full2(1, O_pad),          # layer 4 (padded)
            ],
            out_specs=pl.BlockSpec((tn, O_pad), lambda i: (i, 0)),
        ),
        compiler_params=pltpu.CompilerParams(
            dimension_semantics=("parallel",),
            vmem_limit_bytes=vmem_limit),
    )(x_cat, w1_, b1_, w2_, b2_, w3_, b3_, w4_p, b4_p)

    return out[:, :O]


def init_params(key, n_features, hidden_dim, out_features):
    """Deterministic init matching PyTorch Linear default (U[-1/sqrt(fan_in), +])."""
    dims = [(n_features, hidden_dim),
            (hidden_dim, hidden_dim),
            (hidden_dim, hidden_dim),
            (hidden_dim, out_features)]
    params = []
    for (fan_in, fan_out) in dims:
        key, kw, kb = jax.random.split(key, 3)
        bound = 1.0 / math.sqrt(fan_in)
        w = jax.random.uniform(kw, (fan_in, fan_out), jnp.float32, -bound, bound)
        b = jax.random.uniform(kb, (fan_out,), jnp.float32, -bound, bound)
        params += [w, b]
    return tuple(params)


def decoder_reference(triplane_features, gaussian_features, params):
    w1, b1, w2, b2, w3, b3, w4, b4 = params
    tp = jnp.mean(triplane_features, axis=0)
    x = jnp.concatenate([tp, gaussian_features], axis=-1)
    x = _gelu_exact(x @ w1 + b1)
    x = _gelu_exact(x @ w2 + b2)
    x = _gelu_exact(x @ w3 + b3)
    return x @ w4 + b4


if __name__ == "__main__":
    # Small shapes consistent with the module:
    #   P=3 planes, N=256 points, C=16 triplane channels, G=16 gaussian channels
    #   n_features = C + G = 32, hidden_dim = 128 (module default), out_features = 3
    P, N, C, G = 3, 256, 16, 16
    hidden_dim, out_features = 128, 3
    n_features = C + G

    key = jax.random.PRNGKey(0)
    k_tp, k_g, k_params = jax.random.split(key, 3)
    triplane_features = jax.random.normal(k_tp, (P, N, C), jnp.float32)
    gaussian_features = jax.random.normal(k_g, (N, G), jnp.float32)
    params = init_params(k_params, n_features, hidden_dim, out_features)

    ref = np.asarray(decoder_reference(triplane_features, gaussian_features, params))

    # f32 path with a multi-step grid (tile_n=64 -> grid=(4,)) for exact validation.
    out = decoder_forward(triplane_features, gaussian_features, params, tile_n=64)
    out = jax.block_until_ready(out)
    np.testing.assert_allclose(np.asarray(out), ref, atol=1e-4, rtol=1e-4)

    print("KERNEL_OK")
</pallas_src>

<mosaic_0001>
module attributes {stable_mosaic.version = 11 : i64} {
  func.func @decoder_kernel(%arg0: i32, %arg1: memref<64x64xf32, #tpu.memory_space<vmem>>, %arg2: memref<64x128xf32, #tpu.memory_space<vmem>>, %arg3: memref<1x128xf32, #tpu.memory_space<vmem>>, %arg4: memref<128x128xf32, #tpu.memory_space<vmem>>, %arg5: memref<1x128xf32, #tpu.memory_space<vmem>>, %arg6: memref<128x128xf32, #tpu.memory_space<vmem>>, %arg7: memref<1x128xf32, #tpu.memory_space<vmem>>, %arg8: memref<128x128xf32, #tpu.memory_space<vmem>>, %arg9: memref<1x128xf32, #tpu.memory_space<vmem>>, %arg10: memref<64x128xf32, #tpu.memory_space<vmem>>) attributes {dimension_semantics = [#tpu.dimension_semantics<parallel>], iteration_bounds = array<i64: 4>, scalar_prefetch = 0 : i64, scratch_operands = 0 : i64, tpu.core_type = #tpu.core_type<tc>, window_params = [{transform_indices = @transform_0, window_bounds = array<i64: 64, 64>}, {pipeline_mode = #tpu.pipeline_mode<synchronous>, transform_indices = @transform_1, window_bounds = array<i64: 64, 128>}, {pipeline_mode = #tpu.pipeline_mode<synchronous>, transform_indices = @transform_2, window_bounds = array<i64: 1, 128>}, {pipeline_mode = #tpu.pipeline_mode<synchronous>, transform_indices = @transform_3, window_bounds = array<i64: 128, 128>}, {pipeline_mode = #tpu.pipeline_mode<synchronous>, transform_indices = @transform_4, window_bounds = array<i64: 1, 128>}, {pipeline_mode = #tpu.pipeline_mode<synchronous>, transform_indices = @transform_5, window_bounds = array<i64: 128, 128>}, {pipeline_mode = #tpu.pipeline_mode<synchronous>, transform_indices = @transform_6, window_bounds = array<i64: 1, 128>}, {pipeline_mode = #tpu.pipeline_mode<synchronous>, transform_indices = @transform_7, window_bounds = array<i64: 128, 128>}, {pipeline_mode = #tpu.pipeline_mode<synchronous>, transform_indices = @transform_8, window_bounds = array<i64: 1, 128>}, {transform_indices = @transform_9, window_bounds = array<i64: 64, 128>}]} {
    %c0 = arith.constant 0 : index
    %c0_0 = arith.constant 0 : index
    %0 = vector.load %arg1[%c0, %c0_0] : memref<64x64xf32, #tpu.memory_space<vmem>>, vector<64x64xf32>
    %c0_1 = arith.constant 0 : index
    %c0_2 = arith.constant 0 : index
    %1 = vector.load %arg2[%c0_1, %c0_2] : memref<64x128xf32, #tpu.memory_space<vmem>>, vector<64x128xf32>
    %cst = arith.constant dense<0.000000e+00> : vector<64x128xf32>
    %2 = tpu.matmul %0, %1, %cst {dimension_numbers = #tpu.dot_dimension_numbers<[1], [0], [0], [1], [0, 0, 1, 1], [], []>} : vector<64x64xf32>, vector<64x128xf32>, vector<64x128xf32> -> vector<64x128xf32>
    %c0_3 = arith.constant 0 : index
    %c0_4 = arith.constant 0 : index
    %3 = vector.load %arg3[%c0_3, %c0_4] : memref<1x128xf32, #tpu.memory_space<vmem>>, vector<1x128xf32>
    %4 = vector.broadcast %3 : vector<1x128xf32> to vector<64x128xf32>
    %5 = arith.addf %2, %4 : vector<64x128xf32>
    %cst_5 = arith.constant 5.000000e-01 : f32
    %6 = vector.broadcast %cst_5 : f32 to vector<64x128xf32>
    %7 = arith.mulf %6, %5 : vector<64x128xf32>
    %cst_6 = arith.constant 0.707106769 : f32
    %8 = vector.broadcast %cst_6 : f32 to vector<64x128xf32>
    %9 = arith.mulf %5, %8 : vector<64x128xf32>
    %10 = math.erf %9 : vector<64x128xf32>
    %cst_7 = arith.constant 1.000000e+00 : f32
    %11 = vector.broadcast %cst_7 : f32 to vector<64x128xf32>
    %12 = arith.addf %11, %10 : vector<64x128xf32>
    %13 = arith.mulf %7, %12 : vector<64x128xf32>
    %c0_8 = arith.constant 0 : index
    %c0_9 = arith.constant 0 : index
    %14 = vector.load %arg4[%c0_8, %c0_9] : memref<128x128xf32, #tpu.memory_space<vmem>>, vector<128x128xf32>
    %cst_10 = arith.constant dense<0.000000e+00> : vector<64x128xf32>
    %15 = tpu.matmul %13, %14, %cst_10 {dimension_numbers = #tpu.dot_dimension_numbers<[1], [0], [0], [1], [0, 0, 1, 1], [], []>} : vector<64x128xf32>, vector<128x128xf32>, vector<64x128xf32> -> vector<64x128xf32>
    %c0_11 = arith.constant 0 : index
    %c0_12 = arith.constant 0 : index
    %16 = vector.load %arg5[%c0_11, %c0_12] : memref<1x128xf32, #tpu.memory_space<vmem>>, vector<1x128xf32>
    %17 = vector.broadcast %16 : vector<1x128xf32> to vector<64x128xf32>
    %18 = arith.addf %15, %17 : vector<64x128xf32>
    %cst_13 = arith.constant 5.000000e-01 : f32
    %19 = vector.broadcast %cst_13 : f32 to vector<64x128xf32>
    %20 = arith.mulf %19, %18 : vector<64x128xf32>
    %cst_14 = arith.constant 0.707106769 : f32
    %21 = vector.broadcast %cst_14 : f32 to vector<64x128xf32>
    %22 = arith.mulf %18, %21 : vector<64x128xf32>
    %23 = math.erf %22 : vector<64x128xf32>
    %cst_15 = arith.constant 1.000000e+00 : f32
    %24 = vector.broadcast %cst_15 : f32 to vector<64x128xf32>
    %25 = arith.addf %24, %23 : vector<64x128xf32>
    %26 = arith.mulf %20, %25 : vector<64x128xf32>
    %c0_16 = arith.constant 0 : index
    %c0_17 = arith.constant 0 : index
    %27 = vector.load %arg6[%c0_16, %c0_17] : memref<128x128xf32, #tpu.memory_space<vmem>>, vector<128x128xf32>
    %cst_18 = arith.constant dense<0.000000e+00> : vector<64x128xf32>
    %28 = tpu.matmul %26, %27, %cst_18 {dimension_numbers = #tpu.dot_dimension_numbers<[1], [0], [0], [1], [0, 0, 1, 1], [], []>} : vector<64x128xf32>, vector<128x128xf32>, vector<64x128xf32> -> vector<64x128xf32>
    %c0_19 = arith.constant 0 : index
    %c0_20 = arith.constant 0 : index
    %29 = vector.load %arg7[%c0_19, %c0_20] : memref<1x128xf32, #tpu.memory_space<vmem>>, vector<1x128xf32>
    %30 = vector.broadcast %29 : vector<1x128xf32> to vector<64x128xf32>
    %31 = arith.addf %28, %30 : vector<64x128xf32>
    %cst_21 = arith.constant 5.000000e-01 : f32
    %32 = vector.broadcast %cst_21 : f32 to vector<64x128xf32>
    %33 = arith.mulf %32, %31 : vector<64x128xf32>
    %cst_22 = arith.constant 0.707106769 : f32
    %34 = vector.broadcast %cst_22 : f32 to vector<64x128xf32>
    %35 = arith.mulf %31, %34 : vector<64x128xf32>
    %36 = math.erf %35 : vector<64x128xf32>
    %cst_23 = arith.constant 1.000000e+00 : f32
    %37 = vector.broadcast %cst_23 : f32 to vector<64x128xf32>
    %38 = arith.addf %37, %36 : vector<64x128xf32>
    %39 = arith.mulf %33, %38 : vector<64x128xf32>
    %c0_24 = arith.constant 0 : index
    %c0_25 = arith.constant 0 : index
    %40 = vector.load %arg8[%c0_24, %c0_25] : memref<128x128xf32, #tpu.memory_space<vmem>>, vector<128x128xf32>
    %cst_26 = arith.constant dense<0.000000e+00> : vector<64x128xf32>
    %41 = tpu.matmul %39, %40, %cst_26 {dimension_numbers = #tpu.dot_dimension_numbers<[1], [0], [0], [1], [0, 0, 1, 1], [], []>} : vector<64x128xf32>, vector<128x128xf32>, vector<64x128xf32> -> vector<64x128xf32>
    %c0_27 = arith.constant 0 : index
    %c0_28 = arith.constant 0 : index
    %42 = vector.load %arg9[%c0_27, %c0_28] : memref<1x128xf32, #tpu.memory_space<vmem>>, vector<1x128xf32>
    %43 = vector.broadcast %42 : vector<1x128xf32> to vector<64x128xf32>
    %44 = arith.addf %41, %43 : vector<64x128xf32>
    %c0_29 = arith.constant 0 : index
    %c0_30 = arith.constant 0 : index
    %45 = vector.load %arg10[%c0_29, %c0_30] : memref<64x128xf32, #tpu.memory_space<vmem>>, vector<64x128xf32>
    tpu.vector_store %arg10[%c0_29, %c0_30], %44 {strides = array<i32>} : memref<64x128xf32, #tpu.memory_space<vmem>>, vector<64x128xf32>,
    return
  }
  func.func @transform_0(%arg0: i32) -> (i32, i32) {
    %c0_i32 = arith.constant 0 : i32
    %c0_i32_0 = arith.constant 0 : i32
    return %arg0, %c0_i32 : i32, i32
  }
  func.func @transform_1(%arg0: i32) -> (i32, i32) {
    %c0_i32 = arith.constant 0 : i32
    %c0_i32_0 = arith.constant 0 : i32
    %c0_i32_1 = arith.constant 0 : i32
    return %c0_i32, %c0_i32_0 : i32, i32
  }
  func.func @transform_2(%arg0: i32) -> (i32, i32) {
    %c0_i32 = arith.constant 0 : i32
    %c0_i32_0 = arith.constant 0 : i32
    %c0_i32_1 = arith.constant 0 : i32
    return %c0_i32, %c0_i32_0 : i32, i32
  }
  func.func @transform_3(%arg0: i32) -> (i32, i32) {
    %c0_i32 = arith.constant 0 : i32
    %c0_i32_0 = arith.constant 0 : i32
    %c0_i32_1 = arith.constant 0 : i32
    return %c0_i32, %c0_i32_0 : i32, i32
  }
  func.func @transform_4(%arg0: i32) -> (i32, i32) {
    %c0_i32 = arith.constant 0 : i32
    %c0_i32_0 = arith.constant 0 : i32
    %c0_i32_1 = arith.constant 0 : i32
    return %c0_i32, %c0_i32_0 : i32, i32
  }
  func.func @transform_5(%arg0: i32) -> (i32, i32) {
    %c0_i32 = arith.constant 0 : i32
    %c0_i32_0 = arith.constant 0 : i32
    %c0_i32_1 = arith.constant 0 : i32
    return %c0_i32, %c0_i32_0 : i32, i32
  }
  func.func @transform_6(%arg0: i32) -> (i32, i32) {
    %c0_i32 = arith.constant 0 : i32
    %c0_i32_0 = arith.constant 0 : i32
    %c0_i32_1 = arith.constant 0 : i32
    return %c0_i32, %c0_i32_0 : i32, i32
  }
  func.func @transform_7(%arg0: i32) -> (i32, i32) {
    %c0_i32 = arith.constant 0 : i32
    %c0_i32_0 = arith.constant 0 : i32
    %c0_i32_1 = arith.constant 0 : i32
    return %c0_i32, %c0_i32_0 : i32, i32
  }
  func.func @transform_8(%arg0: i32) -> (i32, i32) {
    %c0_i32 = arith.constant 0 : i32
    %c0_i32_0 = arith.constant 0 : i32
    %c0_i32_1 = arith.constant 0 : i32
    return %c0_i32, %c0_i32_0 : i32, i32
  }
  func.func @transform_9(%arg0: i32) -> (i32, i32) {
    %c0_i32 = arith.constant 0 : i32
    %c0_i32_0 = arith.constant 0 : i32
    return %arg0, %c0_i32 : i32, i32
  }
}

</mosaic_0001>

<llo_original>
// kernel: tpu_custom_call.1
$region0: #{tpu_custom_call.1}
  #allocation0 [shape = 'u32[]', space=smem, size = 0x4, offset = 0x4, fixed_abs, tag = 'smem constant byte address 0x4 - core index']
  #allocation1 [shape = 'u32[144,128]{1,0:T(1,128)}', space=vmem, size = 0x12000, scoped, tag = 'internal scratch']
  %s0 = inlined_call_operand.vmem [shape: f32[256,64], index: 0, kind: input, shape index: {}]
  %s1 = inlined_call_operand.hbm [shape: f32[64,128], index: 1, kind: input, shape index: {}]
  %s2 = inlined_call_operand.hbm [shape: f32[1,128], index: 2, kind: input, shape index: {}]
  %s3 = inlined_call_operand.vmem [shape: f32[128,128], index: 3, kind: input, shape index: {}]
  %s4 = inlined_call_operand.vmem [shape: f32[1,128], index: 4, kind: input, shape index: {}]
  %s5 = inlined_call_operand.vmem [shape: f32[128,128], index: 5, kind: input, shape index: {}]
  %s6 = inlined_call_operand.vmem [shape: f32[1,128], index: 6, kind: input, shape index: {}]
  %s7 = inlined_call_operand.vmem [shape: f32[128,128], index: 7, kind: input, shape index: {}]
  %s8 = inlined_call_operand.vmem [shape: f32[1,128], index: 8, kind: input, shape index: {}]
  %s9 = inlined_call_operand.hbm [shape: f32[256,128], index: 9, kind: output, shape index: {}]
  %s10 = sld [smem:[#allocation0]]
  $region77: #{tpu_custom_call.1} parent=0
    _
  %s12 = ssub.s32 1, %s10
  %s13 = scalar_select 0, %s12, %s10
  $region1: #{tpu_custom_call.1} parent=0
    #allocation2 [shape = 'u8[32768]{0}', space=vmem, size = 0x8000, scoped, tag = 'input window, operand 1, single buffered']
    #allocation3 [shape = 's32[2]{0}', space=sflag, size = 0x8, scoped, tag = 'scoped memory for tpu_custom_call.1']
    #allocation4 [shape = 's32[2]{0}', space=sflag, size = 0x8, scoped, tag = 'scoped memory for tpu_custom_call.1']
    #allocation5 [shape = 'u8[512]{0}', space=vmem, size = 0x400, scoped, tag = 'input window, operand 2, single buffered']
    #allocation6 [shape = 's32[1]{0}', space=sflag, size = 0x4, scoped, tag = 'scoped memory for tpu_custom_call.1']
    #allocation7 [shape = 'u8[65536]{0}', space=vmem, size = 0x10000, scoped, tag = 'output window, operand 0']
    %14 = vsyncpa [#allocation3], 0
    %15 = vsyncpa [#allocation6], 0
    %16 = vsyncpa [#allocation4], 0
    %s17 = scalar_lea.sflag [#allocation4], 1
    %18 = vsyncpa %s17, 0
    loop: start=0, step=1, limit=6
    $region2: #{tpu_custom_call.1} parent=1 // loop_pre_header
      _
    $region3: #{tpu_custom_call.1} parent=1 // loop_header
      %s20 = sphi 0, %s24
      %p21 = scmp.ge.s32.totalorder %s20, 6
      %s30 = sphi 0, %s32
      %s33 = sphi 0, %s30
      %s34 = sphi 0, %s33
      %s50 = sphi 0, %s34
      %s54 = sphi 0, %s54
      %s56 = sphi 0, %s54
      %s57 = sphi 0, %s56
      %s71 = sphi 0, %s57
      %s75 = sphi 0, %s75
      %s77 = sphi 0, %s75
      %s78 = sphi 0, %s77
      %s92 = sphi 0, %s78
      %s96 = sphi 0, %s96
      %s98 = sphi 0, %s96
      %s99 = sphi 0, %s98
      %s113 = sphi 0, %s99
      %s117 = sphi 0, %s117
      %s119 = sphi 0, %s117
      %s120 = sphi 0, %s119
      %s134 = sphi 0, %s120
      %s138 = sphi 0, %s138
      %s140 = sphi 0, %s138
      %s141 = sphi 0, %s140
      %s155 = sphi 0, %s141
      %s159 = sphi 0, %s159
      %s161 = sphi 0, %s159
      %s162 = sphi 0, %s161
      %s176 = sphi 0, %s162
      %s180 = sphi 0, %s180
      %s182 = sphi 0, %s180
      %s183 = sphi 0, %s182
      %s197 = sphi 0, %s183
      %s201 = sphi 0, %s201
      %s203 = sphi 0, %s201
      %s204 = sphi 0, %s203
      %s218 = sphi 0, %s204
      %s224 = sphi 0, %s226
      %s227 = sphi 0, %s224
      %s228 = sphi 0, %s227
      %s244 = sphi 0, %s228
    $region4: #{tpu_custom_call.1} parent=1 // loop_header_branch
      %23 = sbr.rel (%p21) target = $region8
    $region5: #{tpu_custom_call.1} parent=1 // loop_body
      %s25 = ssub.s32 %s20, 1
      %s26 = ssub.s32 %s20, 2
      %s27 = sadd.s32 %s20, 1
      %s28 = ssub.s32 %s20, %s27
      %p29 = scmp.eq.s32.totalorder %s28, 0
      %s31 = sadd.s32 %s30, 1
      %s32 = scalar_select %p29, %s30, %s31
      %p35 = pneg %p29
      %p36 = scmp.eq.s32.totalorder %s20, 3
      %p37 = por %p35, %p36
      %p38 = scmp.ne.s32.totalorder %s30, %s33
      %p39 = scmp.eq.s32.totalorder %s20, 0
      %p40 = por %p38, %p39
      %p41 = scmp.ne.s32.totalorder %s30, %s33
      %p42 = scmp.eq.s32.totalorder %s25, 3
      %p43 = por %p41, %p42
      %p44 = scmp.ne.s32.totalorder %s33, %s34
      %p45 = scmp.eq.s32.totalorder %s25, 0
      %p46 = por %p44, %p45
      %p47 = scmp.ne.s32.totalorder %s33, %s34
      %p48 = scmp.eq.s32.totalorder %s26, 3
      %p49 = por %p47, %p48
      %p51 = scmp.ne.s32.totalorder %s34, %s50
      %p52 = scmp.eq.s32.totalorder %s26, 0
      %p53 = por %p51, %p52
      %s55 = sadd.s32 %s54, 1
      %p58 = scmp.eq.s32.totalorder %s20, 3
      %p59 = scmp.ne.s32.totalorder %s54, %s56
      %p60 = scmp.eq.s32.totalorder %s20, 0
      %p61 = por %p59, %p60
      %p62 = scmp.ne.s32.totalorder %s54, %s56
      %p63 = scmp.eq.s32.totalorder %s25, 3
      %p64 = por %p62, %p63
      %p65 = scmp.ne.s32.totalorder %s56, %s57
      %p66 = scmp.eq.s32.totalorder %s25, 0
      %p67 = por %p65, %p66
      %p68 = scmp.ne.s32.totalorder %s56, %s57
      %p69 = scmp.eq.s32.totalorder %s26, 3
      %p70 = por %p68, %p69
      %p72 = scmp.ne.s32.totalorder %s57, %s71
      %p73 = scmp.eq.s32.totalorder %s26, 0
      %p74 = por %p72, %p73
      %s76 = sadd.s32 %s75, 1
      %p79 = scmp.eq.s32.totalorder %s20, 3
      %p80 = scmp.ne.s32.totalorder %s75, %s77
      %p81 = scmp.eq.s32.totalorder %s20, 0
      %p82 = por %p80, %p81
      %p83 = scmp.ne.s32.totalorder %s75, %s77
      %p84 = scmp.eq.s32.totalorder %s25, 3
      %p85 = por %p83, %p84
      %p86 = scmp.ne.s32.totalorder %s77, %s78
      %p87 = scmp.eq.s32.totalorder %s25, 0
      %p88 = por %p86, %p87
      %p89 = scmp.ne.s32.totalorder %s77, %s78
      %p90 = scmp.eq.s32.totalorder %s26, 3
      %p91 = por %p89, %p90
      %p93 = scmp.ne.s32.totalorder %s78, %s92
      %p94 = scmp.eq.s32.totalorder %s26, 0
      %p95 = por %p93, %p94
      %s97 = sadd.s32 %s96, 1
      %p100 = scmp.eq.s32.totalorder %s20, 3
      %p101 = scmp.ne.s32.totalorder %s96, %s98
      %p102 = scmp.eq.s32.totalorder %s20, 0
      %p103 = por %p101, %p102
      %p104 = scmp.ne.s32.totalorder %s96, %s98
      %p105 = scmp.eq.s32.totalorder %s25, 3
      %p106 = por %p104, %p105
      %p107 = scmp.ne.s32.totalorder %s98, %s99
      %p108 = scmp.eq.s32.totalorder %s25, 0
      %p109 = por %p107, %p108
      %p110 = scmp.ne.s32.totalorder %s98, %s99
      %p111 = scmp.eq.s32.totalorder %s26, 3
      %p112 = por %p110, %p111
      %p114 = scmp.ne.s32.totalorder %s99, %s113
      %p115 = scmp.eq.s32.totalorder %s26, 0
      %p116 = por %p114, %p115
      %s118 = sadd.s32 %s117, 1
      %p121 = scmp.eq.s32.totalorder %s20, 3
      %p122 = scmp.ne.s32.totalorder %s117, %s119
      %p123 = scmp.eq.s32.totalorder %s20, 0
      %p124 = por %p122, %p123
      %p125 = scmp.ne.s32.totalorder %s117, %s119
      %p126 = scmp.eq.s32.totalorder %s25, 3
      %p127 = por %p125, %p126
      %p128 = scmp.ne.s32.totalorder %s119, %s120
      %p129 = scmp.eq.s32.totalorder %s25, 0
      %p130 = por %p128, %p129
      %p131 = scmp.ne.s32.totalorder %s119, %s120
      %p132 = scmp.eq.s32.totalorder %s26, 3
      %p133 = por %p131, %p132
      %p135 = scmp.ne.s32.totalorder %s120, %s134
      %p136 = scmp.eq.s32.totalorder %s26, 0
      %p137 = por %p135, %p136
      %s139 = sadd.s32 %s138, 1
      %p142 = scmp.eq.s32.totalorder %s20, 3
      %p143 = scmp.ne.s32.totalorder %s138, %s140
      %p144 = scmp.eq.s32.totalorder %s20, 0
      %p145 = por %p143, %p144
      %p146 = scmp.ne.s32.totalorder %s138, %s140
      %p147 = scmp.eq.s32.totalorder %s25, 3
      %p148 = por %p146, %p147
      %p149 = scmp.ne.s32.totalorder %s140, %s141
      %p150 = scmp.eq.s32.totalorder %s25, 0
      %p151 = por %p149, %p150
      %p152 = scmp.ne.s32.totalorder %s140, %s141
      %p153 = scmp.eq.s32.totalorder %s26, 3
      %p154 = por %p152, %p153
      %p156 = scmp.ne.s32.totalorder %s141, %s155
      %p157 = scmp.eq.s32.totalorder %s26, 0
      %p158 = por %p156, %p157
      %s160 = sadd.s32 %s159, 1
      %p163 = scmp.eq.s32.totalorder %s20, 3
      %p164 = scmp.ne.s32.totalorder %s159, %s161
      %p165 = scmp.eq.s32.totalorder %s20, 0
      %p166 = por %p164, %p165
      %p167 = scmp.ne.s32.totalorder %s159, %s161
      %p168 = scmp.eq.s32.totalorder %s25, 3
      %p169 = por %p167, %p168
      %p170 = scmp.ne.s32.totalorder %s161, %s162
      %p171 = scmp.eq.s32.totalorder %s25, 0
      %p172 = por %p170, %p171
      %p173 = scmp.ne.s32.totalorder %s161, %s162
      %p174 = scmp.eq.s32.totalorder %s26, 3
      %p175 = por %p173, %p174
      %p177 = scmp.ne.s32.totalorder %s162, %s176
      %p178 = scmp.eq.s32.totalorder %s26, 0
      %p179 = por %p177, %p178
      %s181 = sadd.s32 %s180, 1
      %p184 = scmp.eq.s32.totalorder %s20, 3
      %p185 = scmp.ne.s32.totalorder %s180, %s182
      %p186 = scmp.eq.s32.totalorder %s20, 0
      %p187 = por %p185, %p186
      %p188 = scmp.ne.s32.totalorder %s180, %s182
      %p189 = scmp.eq.s32.totalorder %s25, 3
      %p190 = por %p188, %p189
      %p191 = scmp.ne.s32.totalorder %s182, %s183
      %p192 = scmp.eq.s32.totalorder %s25, 0
      %p193 = por %p191, %p192
      %p194 = scmp.ne.s32.totalorder %s182, %s183
      %p195 = scmp.eq.s32.totalorder %s26, 3
      %p196 = por %p194, %p195
      %p198 = scmp.ne.s32.totalorder %s183, %s197
      %p199 = scmp.eq.s32.totalorder %s26, 0
      %p200 = por %p198, %p199
      %s202 = sadd.s32 %s201, 1
      %p205 = scmp.eq.s32.totalorder %s20, 3
      %p206 = scmp.ne.s32.totalorder %s201, %s203
      %p207 = scmp.eq.s32.totalorder %s20, 0
      %p208 = por %p206, %p207
      %p209 = scmp.ne.s32.totalorder %s201, %s203
      %p210 = scmp.eq.s32.totalorder %s25, 3
      %p211 = por %p209, %p210
      %p212 = scmp.ne.s32.totalorder %s203, %s204
      %p213 = scmp.eq.s32.totalorder %s25, 0
      %p214 = por %p212, %p213
      %p215 = scmp.ne.s32.totalorder %s203, %s204
      %p216 = scmp.eq.s32.totalorder %s26, 3
      %p217 = por %p215, %p216
      %p219 = scmp.ne.s32.totalorder %s204, %s218
      %p220 = scmp.eq.s32.totalorder %s26, 0
      %p221 = por %p219, %p220
      %s222 = ssub.s32 %s20, %s27
      %p223 = scmp.eq.s32.totalorder %s222, 0
      %s225 = sadd.s32 %s224, 1
      %s226 = scalar_select %p223, %s224, %s225
      %p229 = pneg %p223
      %p230 = scmp.eq.s32.totalorder %s20, 3
      %p231 = por %p229, %p230
      %p232 = scmp.ne.s32.totalorder %s224, %s227
      %p233 = scmp.eq.s32.totalorder %s20, 0
      %p234 = por %p232, %p233
      %p235 = scmp.ne.s32.totalorder %s224, %s227
      %p236 = scmp.eq.s32.totalorder %s25, 3
      %p237 = por %p235, %p236
      %p238 = scmp.ne.s32.totalorder %s227, %s228
      %p239 = scmp.eq.s32.totalorder %s25, 0
      %p240 = por %p238, %p239
      %p241 = scmp.ne.s32.totalorder %s227, %s228
      %p242 = scmp.eq.s32.totalorder %s26, 3
      %p243 = por %p241, %p242
      %p245 = scmp.ne.s32.totalorder %s228, %s244
      %p246 = scmp.eq.s32.totalorder %s26, 0
      %p247 = por %p245, %p246
      %p248 = scmp.le.s32.totalorder 1, %s20
      %p249 = scmp.lt.s32.totalorder %s20, 5
      %p250 = pnand %p248, %p249
      %p251 = pneg %p250
      // Predicated region
      $region9: #{tpu_custom_call.1} parent=5 // pred_check
        _
      $region10: #{tpu_custom_call.1} parent=5 // pred_check_branch
        %253 = sbr.rel (%p250) target = $region12
      $region11: #{tpu_custom_call.1} parent=5 // pred_region
        %s254 = ssub.s32 %s20, 1
        // Predicated region
        $region13: #{tpu_custom_call.1} parent=11 // pred_check
          %p255 = pneg %p67
        $region14: #{tpu_custom_call.1} parent=11 // pred_check_branch
          %257 = sbr.rel (%p255) target = $region16
        $region15: #{tpu_custom_call.1} parent=11 // pred_region
          %s259 = ssub.s32 1024, 1024
          %260 = vsyncadd [#allocation3], %s259
          %s261 = sshll.u32 [#allocation2], 4
          %s262 = int_to_ptr.vmem [resolvable:$true] %s261
          %267 = dma.hbm_to_vmem [thread:$0]  %s1, 1024, %s262, [#allocation3], 128, 128, 8
        $region16: #{tpu_custom_call.1} parent=11 // pred_fallthru
          _
        // Predicated region
        $region17: #{tpu_custom_call.1} parent=11 // pred_check
          %p268 = pneg %p88
        $region18: #{tpu_custom_call.1} parent=11 // pred_check_branch
          %270 = sbr.rel (%p268) target = $region20
        $region19: #{tpu_custom_call.1} parent=11 // pred_region
          %s272 = ssub.s32 16, 16
          %273 = vsyncadd [#allocation6], %s272
          %s275 = sshll.u32 [#allocation5], 4
          %s276 = int_to_ptr.vmem [resolvable:$true] %s275
          %278 = dma.hbm_to_vmem [thread:$0]  %s2, 16, %s276, [#allocation6]
        $region20: #{tpu_custom_call.1} parent=11 // pred_fallthru
          _
        // Predicated region
        $region21: #{tpu_custom_call.1} parent=11 // pred_check
          %p279 = pneg %p109
        $region22: #{tpu_custom_call.1} parent=11 // pred_check_branch
          %281 = sbr.rel (%p279) target = $region24
        $region23: #{tpu_custom_call.1} parent=11 // pred_region
          _
        $region24: #{tpu_custom_call.1} parent=11 // pred_fallthru
          _
        // Predicated region
        $region25: #{tpu_custom_call.1} parent=11 // pred_check
          %p282 = pneg %p130
        $region26: #{tpu_custom_call.1} parent=11 // pred_check_branch
          %284 = sbr.rel (%p282) target = $region28
        $region27: #{tpu_custom_call.1} parent=11 // pred_region
          _
        $region28: #{tpu_custom_call.1} parent=11 // pred_fallthru
          _
        // Predicated region
        $region29: #{tpu_custom_call.1} parent=11 // pred_check
          %p285 = pneg %p151
        $region30: #{tpu_custom_call.1} parent=11 // pred_check_branch
          %287 = sbr.rel (%p285) target = $region32
        $region31: #{tpu_custom_call.1} parent=11 // pred_region
          _
        $region32: #{tpu_custom_call.1} parent=11 // pred_fallthru
          _
        // Predicated region
        $region33: #{tpu_custom_call.1} parent=11 // pred_check
          %p288 = pneg %p172
        $region34: #{tpu_custom_call.1} parent=11 // pred_check_branch
          %290 = sbr.rel (%p288) target = $region36
        $region35: #{tpu_custom_call.1} parent=11 // pred_region
          _
        $region36: #{tpu_custom_call.1} parent=11 // pred_fallthru
          _
        // Predicated region
        $region37: #{tpu_custom_call.1} parent=11 // pred_check
          %p291 = pneg %p193
        $region38: #{tpu_custom_call.1} parent=11 // pred_check_branch
          %293 = sbr.rel (%p291) target = $region40
        $region39: #{tpu_custom_call.1} parent=11 // pred_region
          _
        $region40: #{tpu_custom_call.1} parent=11 // pred_fallthru
          _
        // Predicated region
        $region41: #{tpu_custom_call.1} parent=11 // pred_check
          %p294 = pneg %p214
        $region42: #{tpu_custom_call.1} parent=11 // pred_check_branch
          %296 = sbr.rel (%p294) target = $region44
        $region43: #{tpu_custom_call.1} parent=11 // pred_region
          _
        $region44: #{tpu_custom_call.1} parent=11 // pred_fallthru
          _
      $region12: #{tpu_custom_call.1} parent=5 // pred_fallthru
        _
      %p297 = scmp.lt.s32.totalorder %s20, 4
      // Predicated region
      $region45: #{tpu_custom_call.1} parent=5 // pred_check
        %p298 = pneg %p297
      $region46: #{tpu_custom_call.1} parent=5 // pred_check_branch
        %300 = sbr.rel (%p298) target = $region48
      $region47: #{tpu_custom_call.1} parent=5 // pred_region
        // Predicated region
        $region49: #{tpu_custom_call.1} parent=47 // pred_check
          %p301 = pneg %p40
        $region50: #{tpu_custom_call.1} parent=47 // pred_check_branch
          %303 = sbr.rel (%p301) target = $region52
        $region51: #{tpu_custom_call.1} parent=47 // pred_region
          %s304 = smul.u32 8, %s20
          %p305 = scmp.lt.s32.totalorder %s304, 31
          %s306 = scalar_select %p305, %s304, 31
          %s307 = smul.addr %s306, 8
          %s308 = scalar_lea.vmem %s0, %s307
          %s309 = smul.u32 8, %s20
        $region52: #{tpu_custom_call.1} parent=47 // pred_fallthru
          _
      $region48: #{tpu_custom_call.1} parent=5 // pred_fallthru
        _
      %p310 = scmp.le.s32.totalorder 1, %s20
      %p311 = scmp.lt.s32.totalorder %s20, 5
      %p312 = pnand %p310, %p311
      %p313 = pneg %p312
      // Predicated region
      $region53: #{tpu_custom_call.1} parent=5 // pred_check
        _
      $region54: #{tpu_custom_call.1} parent=5 // pred_check_branch
        %315 = sbr.rel (%p312) target = $region56
      $region55: #{tpu_custom_call.1} parent=5 // pred_region
        %s316 = ssub.s32 %s20, 1
        // Predicated region
        $region57: #{tpu_custom_call.1} parent=55 // pred_check
          %p317 = pneg %p67
        $region58: #{tpu_custom_call.1} parent=55 // pred_check_branch
          %319 = sbr.rel (%p317) target = $region60
        $region59: #{tpu_custom_call.1} parent=55 // pred_region
          %320 = dma.done [#allocation3], 1024
        $region60: #{tpu_custom_call.1} parent=55 // pred_fallthru
          _
        // Predicated region
        $region61: #{tpu_custom_call.1} parent=55 // pred_check
          %p321 = pneg %p88
        $region62: #{tpu_custom_call.1} parent=55 // pred_check_branch
          %323 = sbr.rel (%p321) target = $region64
        $region63: #{tpu_custom_call.1} parent=55 // pred_region
          %324 = dma.done [#allocation6], 16
        $region64: #{tpu_custom_call.1} parent=55 // pred_fallthru
          _
        %s325 = smul.u32 8, %s25
        %p326 = scmp.lt.s32.totalorder %s325, 31
        %s327 = scalar_select %p326, %s325, 31
        %s328 = smul.addr %s327, 8
        %s329 = scalar_lea.vmem %s0, %s328
        %p330 = pneg %p46
        %p331 = pneg %p43
        %p332 = pneg %p67
        %p333 = pneg %p64
        %p334 = pneg %p88
        %p335 = pneg %p85
        %p336 = pneg %p109
        %p337 = pneg %p106
        %p338 = pneg %p130
        %p339 = pneg %p127
        %p340 = pneg %p151
        %p341 = pneg %p148
        %p342 = pneg %p172
        %p343 = pneg %p169
        %p344 = pneg %p193
        %p345 = pneg %p190
        %p346 = pneg %p214
        %p347 = pneg %p211
        %p348 = pneg %p240
        %p349 = pneg %p237
        %s350 = sand.u32 %s227, 1
        %s351 = scalar_lea.sflag [#allocation4], %s350
        %s352 = sand.u32 %s227, 1
        %s353 = smul.addr %s352, 64
        %s354 = scalar_lea.vmem [#allocation7], %s353
        %s355 = smul.u32 8, %s25
        %p356 = scmp.lt.s32.totalorder %s355, 31
        %s357 = scalar_select %p356, %s355, 31
        %s358 = smul.addr %s357, 8
        %s359 = scalar_lea.vmem %s0, %s358
        %s360 = smul.u32 8, %s25
        %s361 = smul.u32 8, %s25
        %v362 = vld [vmem:[%s359] sm:$0xff]
        %v363 = vld [vmem:[%s359 + $0x8] sm:$0xff]
        %v364 = vld [vmem:[%s359 + $0x10] sm:$0xff]
        %v365 = vld [vmem:[%s359 + $0x18] sm:$0xff]
        %v366 = vld [vmem:[%s359 + $0x20] sm:$0xff]
        %v367 = vld [vmem:[%s359 + $0x28] sm:$0xff]
        %v368 = vld [vmem:[%s359 + $0x30] sm:$0xff]
        %v369 = vld [vmem:[%s359 + $0x38] sm:$0xff]
        %v370 = vld [vmem:[#allocation2] sm:$0xff]
        %v371 = vld [vmem:[#allocation2 + $0x8] sm:$0xff]
        %v372 = vld [vmem:[#allocation2 + $0x10] sm:$0xff]
        %v373 = vld [vmem:[#allocation2 + $0x18] sm:$0xff]
        %v374 = vld [vmem:[#allocation2 + $0x20] sm:$0xff]
        %v375 = vld [vmem:[#allocation2 + $0x28] sm:$0xff]
        %v376 = vld [vmem:[#allocation2 + $0x30] sm:$0xff]
        %v377 = vld [vmem:[#allocation2 + $0x38] sm:$0xff]
        %v378 = vld [vmem:[#allocation5] sm:$0x1]
        %v380 = vlaneseq
        %v381 = vshrl.u32 %v380, 7
        %v382 = vsub.s32 0, %v381
        %v383 = vrot.slane %v378, %v382
        %vm385 = vcmask 523264
        %v387 = vsel %vm385, %v362, 0
        %v390 = vsel %vm385, %v363, 0
        %v393 = vsel %vm385, %v364, 0
        %v396 = vsel %vm385, %v365, 0
        %v399 = vsel %vm385, %v366, 0
        %v402 = vsel %vm385, %v367, 0
        %v405 = vsel %vm385, %v368, 0
        %v408 = vsel %vm385, %v369, 0
        %410 = vmatprep.subr.mxu0 0.0
        %411 = vmatpush1.msra.mxu0 0.0
        %412 = vmatprep.subr.mxu0 0.0
        %413 = vmatpush1.msra.mxu0 0.0
        %414 = vmatprep.subr.mxu0 0.0
        %415 = vmatpush1.msra.mxu0 0.0
        %416 = vmatprep.subr.mxu0 0.0
        %417 = vmatpush1.msra.mxu0 0.0
        %418 = vmatprep.subr.mxu0 0.0
        %419 = vmatpush1.msra.mxu0 0.0
        %420 = vmatprep.subr.mxu0 0.0
        %421 = vmatpush1.msra.mxu0 0.0
        %422 = vmatprep.subr.mxu0 0.0
        %423 = vmatpush1.msra.mxu0 0.0
        %424 = vmatprep.subr.mxu0 0.0
        %425 = vmatpush1.msra.mxu0 0.0
        %426 = vmatprep.subr.mxu0 0.0
        %427 = vmatpush1.msra.mxu0 %v377
        %428 = vmatprep.subr.mxu0 0.0
        %429 = vmatpush1.msra.mxu0 %v376
        %430 = vmatprep.subr.mxu0 0.0
        %431 = vmatpush1.msra.mxu0 %v375
        %432 = vmatprep.subr.mxu0 0.0
        %433 = vmatpush1.msra.mxu0 %v374
        %434 = vmatprep.subr.mxu0 0.0
        %435 = vmatpush1.msra.mxu0 %v373
        %436 = vmatprep.subr.mxu0 0.0
        %437 = vmatpush1.msra.mxu0 %v372
        %438 = vmatprep.subr.mxu0 0.0
        %439 = vmatpush1.msra.mxu0 %v371
        %440 = vmatprep.subr.mxu0 0.0
        %441 = vmatpush1.msra.mxu0 %v370
        %442 = vmatprep.subr.mxu0 0.0
        %443 = vmatpush2.msra.mxu0 0.0
        %444 = vmatprep.subr.mxu0 0.0
        %445 = vmatpush2.msra.mxu0 0.0
        %446 = vmatprep.subr.mxu0 0.0
        %447 = vmatpush2.msra.mxu0 0.0
        %448 = vmatprep.subr.mxu0 0.0
        %449 = vmatpush2.msra.mxu0 0.0
        %450 = vmatprep.subr.mxu0 0.0
        %451 = vmatpush2.msra.mxu0 0.0
        %452 = vmatprep.subr.mxu0 0.0
        %453 = vmatpush2.msra.mxu0 0.0
        %454 = vmatprep.subr.mxu0 0.0
        %455 = vmatpush2.msra.mxu0 0.0
        %456 = vmatprep.subr.mxu0 0.0
        %457 = vmatpush2.msra.mxu0 0.0
        %458 = vmatprep.subr.mxu0 0.0
        %459 = vmatpush2.msra.mxu0 0.0
        %460 = vmatprep.subr.mxu0 0.0
        %461 = vmatpush2.msra.mxu0 0.0
        %462 = vmatprep.subr.mxu0 0.0
        %463 = vmatpush2.msra.mxu0 0.0
        %464 = vmatprep.subr.mxu0 0.0
        %465 = vmatpush2.msra.mxu0 0.0
        %466 = vmatprep.subr.mxu0 0.0
        %467 = vmatpush2.msra.mxu0 0.0
        %468 = vmatprep.subr.mxu0 0.0
        %469 = vmatpush2.msra.mxu0 0.0
        %470 = vmatprep.subr.mxu0 0.0
        %471 = vmatpush2.msra.mxu0 0.0
        %472 = vmatprep.subr.mxu0 0.0
        %473 = vmatpush2.msra.mxu0 0.0
        %474 = vmatprep.mubr.f32.mxu0 0.0
        %475 = vmatmul.mubr.f32.gmra.mxu0 %v387
        %v476 = vpop.f32.mrf.mxu0
        %v477 = vadd.f32 %v383, %v476
        %v478 = vpop.f32.mrf.mxu0
        %479 = vmatprep.mubr.f32.mxu0 0.0
        %480 = vmatmul.mubr.f32.gmra.mxu0 %v390
        %v481 = vpop.f32.mrf.mxu0
        %v482 = vadd.f32 %v383, %v481
        %v483 = vpop.f32.mrf.mxu0
        %484 = vmatprep.mubr.f32.mxu0 0.0
        %485 = vmatmul.mubr.f32.gmra.mxu0 %v393
        %v486 = vpop.f32.mrf.mxu0
        %v487 = vadd.f32 %v383, %v486
        %v488 = vpop.f32.mrf.mxu0
        %489 = vmatprep.mubr.f32.mxu0 0.0
        %490 = vmatmul.mubr.f32.gmra.mxu0 %v396
        %v491 = vpop.f32.mrf.mxu0
        %v492 = vadd.f32 %v383, %v491
        %v493 = vpop.f32.mrf.mxu0
        %494 = vmatprep.mubr.f32.mxu0 0.0
        %495 = vmatmul.mubr.f32.gmra.mxu0 %v399
        %v496 = vpop.f32.mrf.mxu0
        %v497 = vadd.f32 %v383, %v496
        %v498 = vpop.f32.mrf.mxu0
        %499 = vmatprep.mubr.f32.mxu0 0.0
        %500 = vmatmul.mubr.f32.gmra.mxu0 %v402
        %v501 = vpop.f32.mrf.mxu0
        %v502 = vadd.f32 %v383, %v501
        %v503 = vpop.f32.mrf.mxu0
        %504 = vmatprep.mubr.f32.mxu0 0.0
        %505 = vmatmul.mubr.f32.gmra.mxu0 %v405
        %v506 = vpop.f32.mrf.mxu0
        %v507 = vadd.f32 %v383, %v506
        %v508 = vpop.f32.mrf.mxu0
        %509 = vmatprep.mubr.f32.mxu0 0.0
        %510 = vmatmul.mubr.f32.gmra.mxu0 %v408
        %v511 = vpop.f32.mrf.mxu0
        %v512 = vadd.f32 %v383, %v511
        %v513 = vpop.f32.mrf.mxu0
        %514 = vdwg.mxu0
        %v515 = vmul.f32 %v477, 0.5
        %v516 = vmul.f32 %v482, 0.5
        %v517 = vmul.f32 %v487, 0.5
        %v518 = vmul.f32 %v492, 0.5
        %v519 = vmul.f32 %v497, 0.5
        %v520 = vmul.f32 %v502, 0.5
        %v521 = vmul.f32 %v507, 0.5
        %v522 = vmul.f32 %v512, 0.5
        %v523 = vmul.f32 %v477, 0.70710677
        %v524 = vmul.f32 %v482, 0.70710677
        %v525 = vmul.f32 %v487, 0.70710677
        %v526 = vmul.f32 %v492, 0.70710677
        %v527 = vmul.f32 %v497, 0.70710677
        %v528 = vmul.f32 %v502, 0.70710677
        %v529 = vmul.f32 %v507, 0.70710677
        %v530 = vmul.f32 %v512, 0.70710677
        %v531 = verf.f32.pop %v523
        %v532 = verf.f32.pop %v524
        %v533 = verf.f32.pop %v525
        %v534 = verf.f32.pop %v526
        %v535 = verf.f32.pop %v527
        %v536 = verf.f32.pop %v528
        %v537 = verf.f32.pop %v529
        %v538 = verf.f32.pop %v530
        %v539 = vadd.f32 %v531, 1.0
        %v540 = vadd.f32 %v532, 1.0
        %v541 = vadd.f32 %v533, 1.0
        %v542 = vadd.f32 %v534, 1.0
        %v543 = vadd.f32 %v535, 1.0
        %v544 = vadd.f32 %v536, 1.0
        %v545 = vadd.f32 %v537, 1.0
        %v546 = vadd.f32 %v538, 1.0
        %v547 = vmul.f32 %v515, %v539
        %v548 = vmul.f32 %v516, %v540
        %v549 = vmul.f32 %v517, %v541
        %v550 = vmul.f32 %v518, %v542
        %v551 = vmul.f32 %v519, %v543
        %v552 = vmul.f32 %v520, %v544
        %v553 = vmul.f32 %v521, %v545
        %v554 = vmul.f32 %v522, %v546
        %v555 = vld [vmem:[%s3] sm:$0xff]
        %v556 = vld [vmem:[%s3 + $0x8] sm:$0xff]
        %v557 = vld [vmem:[%s3 + $0x10] sm:$0xff]
        %v558 = vld [vmem:[%s3 + $0x18] sm:$0xff]
        %v559 = vld [vmem:[%s3 + $0x20] sm:$0xff]
        %v560 = vld [vmem:[%s3 + $0x28] sm:$0xff]
        %v561 = vld [vmem:[%s3 + $0x30] sm:$0xff]
        %v562 = vld [vmem:[%s3 + $0x38] sm:$0xff]
        %v563 = vld [vmem:[%s3 + $0x40] sm:$0xff]
        %v564 = vld [vmem:[%s3 + $0x48] sm:$0xff]
        %v565 = vld [vmem:[%s3 + $0x50] sm:$0xff]
        %v566 = vld [vmem:[%s3 + $0x58] sm:$0xff]
        %v567 = vld [vmem:[%s3 + $0x60] sm:$0xff]
        %v568 = vld [vmem:[%s3 + $0x68] sm:$0xff]
        %v569 = vld [vmem:[%s3 + $0x70] sm:$0xff]
        %v570 = vld [vmem:[%s3 + $0x78] sm:$0xff]
        %v571 = vld [vmem:[%s4] sm:$0x1]
        %v573 = vlaneseq
        %v574 = vshrl.u32 %v573, 7
        %v575 = vsub.s32 0, %v574
        %v576 = vrot.slane %v571, %v575
        %578 = vmatprep.subr.mxu0 0.0
        %579 = vmatpush1.msra.mxu0 %v570
        %580 = vmatprep.subr.mxu0 0.0
        %581 = vmatpush1.msra.mxu0 %v569
        %582 = vmatprep.subr.mxu0 0.0
        %583 = vmatpush1.msra.mxu0 %v568
        %584 = vmatprep.subr.mxu0 0.0
        %585 = vmatpush1.msra.mxu0 %v567
        %586 = vmatprep.subr.mxu0 0.0
        %587 = vmatpush1.msra.mxu0 %v566
        %588 = vmatprep.subr.mxu0 0.0
        %589 = vmatpush1.msra.mxu0 %v565
        %590 = vmatprep.subr.mxu0 0.0
        %591 = vmatpush1.msra.mxu0 %v564
        %592 = vmatprep.subr.mxu0 0.0
        %593 = vmatpush1.msra.mxu0 %v563
        %594 = vmatprep.subr.mxu0 0.0
        %595 = vmatpush1.msra.mxu0 %v562
        %596 = vmatprep.subr.mxu0 0.0
        %597 = vmatpush1.msra.mxu0 %v561
        %598 = vmatprep.subr.mxu0 0.0
        %599 = vmatpush1.msra.mxu0 %v560
        %600 = vmatprep.subr.mxu0 0.0
        %601 = vmatpush1.msra.mxu0 %v559
        %602 = vmatprep.subr.mxu0 0.0
        %603 = vmatpush1.msra.mxu0 %v558
        %604 = vmatprep.subr.mxu0 0.0
        %605 = vmatpush1.msra.mxu0 %v557
        %606 = vmatprep.subr.mxu0 0.0
        %607 = vmatpush1.msra.mxu0 %v556
        %608 = vmatprep.subr.mxu0 0.0
        %609 = vmatpush1.msra.mxu0 %v555
        %610 = vmatprep.subr.mxu0 0.0
        %611 = vmatpush2.msra.mxu0 0.0
        %612 = vmatprep.subr.mxu0 0.0
        %613 = vmatpush2.msra.mxu0 0.0
        %614 = vmatprep.subr.mxu0 0.0
        %615 = vmatpush2.msra.mxu0 0.0
        %616 = vmatprep.subr.mxu0 0.0
        %617 = vmatpush2.msra.mxu0 0.0
        %618 = vmatprep.subr.mxu0 0.0
        %619 = vmatpush2.msra.mxu0 0.0
        %620 = vmatprep.subr.mxu0 0.0
        %621 = vmatpush2.msra.mxu0 0.0
        %622 = vmatprep.subr.mxu0 0.0
        %623 = vmatpush2.msra.mxu0 0.0
        %624 = vmatprep.subr.mxu0 0.0
        %625 = vmatpush2.msra.mxu0 0.0
        %626 = vmatprep.subr.mxu0 0.0
        %627 = vmatpush2.msra.mxu0 0.0
        %628 = vmatprep.subr.mxu0 0.0
        %629 = vmatpush2.msra.mxu0 0.0
        %630 = vmatprep.subr.mxu0 0.0
        %631 = vmatpush2.msra.mxu0 0.0
        %632 = vmatprep.subr.mxu0 0.0
        %633 = vmatpush2.msra.mxu0 0.0
        %634 = vmatprep.subr.mxu0 0.0
        %635 = vmatpush2.msra.mxu0 0.0
        %636 = vmatprep.subr.mxu0 0.0
        %637 = vmatpush2.msra.mxu0 0.0
        %638 = vmatprep.subr.mxu0 0.0
        %639 = vmatpush2.msra.mxu0 0.0
        %640 = vmatprep.subr.mxu0 0.0
        %641 = vmatpush2.msra.mxu0 0.0
        %642 = vmatprep.mubr.f32.mxu0 0.0
        %643 = vmatmul.mubr.f32.gmra.mxu0 %v547
        %v644 = vpop.f32.mrf.mxu0
        %v645 = vadd.f32 %v576, %v644
        %v646 = vpop.f32.mrf.mxu0
        %647 = vmatprep.mubr.f32.mxu0 0.0
        %648 = vmatmul.mubr.f32.gmra.mxu0 %v548
        %v649 = vpop.f32.mrf.mxu0
        %v650 = vadd.f32 %v576, %v649
        %v651 = vpop.f32.mrf.mxu0
        %652 = vmatprep.mubr.f32.mxu0 0.0
        %653 = vmatmul.mubr.f32.gmra.mxu0 %v549
        %v654 = vpop.f32.mrf.mxu0
        %v655 = vadd.f32 %v576, %v654
        %v656 = vpop.f32.mrf.mxu0
        %657 = vmatprep.mubr.f32.mxu0 0.0
        %658 = vmatmul.mubr.f32.gmra.mxu0 %v550
        %v659 = vpop.f32.mrf.mxu0
        %v660 = vadd.f32 %v576, %v659
        %v661 = vpop.f32.mrf.mxu0
        %662 = vmatprep.mubr.f32.mxu0 0.0
        %663 = vmatmul.mubr.f32.gmra.mxu0 %v551
        %v664 = vpop.f32.mrf.mxu0
        %v665 = vadd.f32 %v576, %v664
        %v666 = vpop.f32.mrf.mxu0
        %667 = vmatprep.mubr.f32.mxu0 0.0
        %668 = vmatmul.mubr.f32.gmra.mxu0 %v552
        %v669 = vpop.f32.mrf.mxu0
        %v670 = vadd.f32 %v576, %v669
        %v671 = vpop.f32.mrf.mxu0
        %672 = vmatprep.mubr.f32.mxu0 0.0
        %673 = vmatmul.mubr.f32.gmra.mxu0 %v553
        %v674 = vpop.f32.mrf.mxu0
        %v675 = vadd.f32 %v576, %v674
        %v676 = vpop.f32.mrf.mxu0
        %677 = vmatprep.mubr.f32.mxu0 0.0
        %678 = vmatmul.mubr.f32.gmra.mxu0 %v554
        %v679 = vpop.f32.mrf.mxu0
        %v680 = vadd.f32 %v576, %v679
        %v681 = vpop.f32.mrf.mxu0
        %682 = vdwg.mxu0
        %v683 = vmul.f32 %v645, 0.5
        %v684 = vmul.f32 %v650, 0.5
        %v685 = vmul.f32 %v655, 0.5
        %v686 = vmul.f32 %v660, 0.5
        %v687 = vmul.f32 %v665, 0.5
        %v688 = vmul.f32 %v670, 0.5
        %v689 = vmul.f32 %v675, 0.5
        %v690 = vmul.f32 %v680, 0.5
        %v691 = vmul.f32 %v645, 0.70710677
        %v692 = vmul.f32 %v650, 0.70710677
        %v693 = vmul.f32 %v655, 0.70710677
        %v694 = vmul.f32 %v660, 0.70710677
        %v695 = vmul.f32 %v665, 0.70710677
        %v696 = vmul.f32 %v670, 0.70710677
        %v697 = vmul.f32 %v675, 0.70710677
        %v698 = vmul.f32 %v680, 0.70710677
        %v699 = verf.f32.pop %v691
        %v700 = verf.f32.pop %v692
        %v701 = verf.f32.pop %v693
        %v702 = verf.f32.pop %v694
        %v703 = verf.f32.pop %v695
        %v704 = verf.f32.pop %v696
        %v705 = verf.f32.pop %v697
        %v706 = verf.f32.pop %v698
        %v707 = vadd.f32 %v699, 1.0
        %v708 = vadd.f32 %v700, 1.0
        %v709 = vadd.f32 %v701, 1.0
        %v710 = vadd.f32 %v702, 1.0
        %v711 = vadd.f32 %v703, 1.0
        %v712 = vadd.f32 %v704, 1.0
        %v713 = vadd.f32 %v705, 1.0
        %v714 = vadd.f32 %v706, 1.0
        %v715 = vmul.f32 %v683, %v707
        %v716 = vmul.f32 %v684, %v708
        %v717 = vmul.f32 %v685, %v709
        %v718 = vmul.f32 %v686, %v710
        %v719 = vmul.f32 %v687, %v711
        %v720 = vmul.f32 %v688, %v712
        %v721 = vmul.f32 %v689, %v713
        %v722 = vmul.f32 %v690, %v714
        %v723 = vld [vmem:[%s5] sm:$0xff]
        %v724 = vld [vmem:[%s5 + $0x8] sm:$0xff]
        %v725 = vld [vmem:[%s5 + $0x10] sm:$0xff]
        %v726 = vld [vmem:[%s5 + $0x18] sm:$0xff]
        %v727 = vld [vmem:[%s5 + $0x20] sm:$0xff]
        %v728 = vld [vmem:[%s5 + $0x28] sm:$0xff]
        %v729 = vld [vmem:[%s5 + $0x30] sm:$0xff]
        %v730 = vld [vmem:[%s5 + $0x38] sm:$0xff]
        %v731 = vld [vmem:[%s5 + $0x40] sm:$0xff]
        %v732 = vld [vmem:[%s5 + $0x48] sm:$0xff]
        %v733 = vld [vmem:[%s5 + $0x50] sm:$0xff]
        %v734 = vld [vmem:[%s5 + $0x58] sm:$0xff]
        %v735 = vld [vmem:[%s5 + $0x60] sm:$0xff]
        %v736 = vld [vmem:[%s5 + $0x68] sm:$0xff]
        %v737 = vld [vmem:[%s5 + $0x70] sm:$0xff]
        %v738 = vld [vmem:[%s5 + $0x78] sm:$0xff]
        %v739 = vld [vmem:[%s6] sm:$0x1]
        %v741 = vlaneseq
        %v742 = vshrl.u32 %v741, 7
        %v743 = vsub.s32 0, %v742
        %v744 = vrot.slane %v739, %v743
        %746 = vmatprep.subr.mxu0 0.0
        %747 = vmatpush1.msra.mxu0 %v738
        %748 = vmatprep.subr.mxu0 0.0
        %749 = vmatpush1.msra.mxu0 %v737
        %750 = vmatprep.subr.mxu0 0.0
        %751 = vmatpush1.msra.mxu0 %v736
        %752 = vmatprep.subr.mxu0 0.0
        %753 = vmatpush1.msra.mxu0 %v735
        %754 = vmatprep.subr.mxu0 0.0
        %755 = vmatpush1.msra.mxu0 %v734
        %756 = vmatprep.subr.mxu0 0.0
        %757 = vmatpush1.msra.mxu0 %v733
        %758 = vmatprep.subr.mxu0 0.0
        %759 = vmatpush1.msra.mxu0 %v732
        %760 = vmatprep.subr.mxu0 0.0
        %761 = vmatpush1.msra.mxu0 %v731
        %762 = vmatprep.subr.mxu0 0.0
        %763 = vmatpush1.msra.mxu0 %v730
        %764 = vmatprep.subr.mxu0 0.0
        %765 = vmatpush1.msra.mxu0 %v729
        %766 = vmatprep.subr.mxu0 0.0
        %767 = vmatpush1.msra.mxu0 %v728
        %768 = vmatprep.subr.mxu0 0.0
        %769 = vmatpush1.msra.mxu0 %v727
        %770 = vmatprep.subr.mxu0 0.0
        %771 = vmatpush1.msra.mxu0 %v726
        %772 = vmatprep.subr.mxu0 0.0
        %773 = vmatpush1.msra.mxu0 %v725
        %774 = vmatprep.subr.mxu0 0.0
        %775 = vmatpush1.msra.mxu0 %v724
        %776 = vmatprep.subr.mxu0 0.0
        %777 = vmatpush1.msra.mxu0 %v723
        %778 = vmatprep.subr.mxu0 0.0
        %779 = vmatpush2.msra.mxu0 0.0
        %780 = vmatprep.subr.mxu0 0.0
        %781 = vmatpush2.msra.mxu0 0.0
        %782 = vmatprep.subr.mxu0 0.0
        %783 = vmatpush2.msra.mxu0 0.0
        %784 = vmatprep.subr.mxu0 0.0
        %785 = vmatpush2.msra.mxu0 0.0
        %786 = vmatprep.subr.mxu0 0.0
        %787 = vmatpush2.msra.mxu0 0.0
        %788 = vmatprep.subr.mxu0 0.0
        %789 = vmatpush2.msra.mxu0 0.0
        %790 = vmatprep.subr.mxu0 0.0
        %791 = vmatpush2.msra.mxu0 0.0
        %792 = vmatprep.subr.mxu0 0.0
        %793 = vmatpush2.msra.mxu0 0.0
        %794 = vmatprep.subr.mxu0 0.0
        %795 = vmatpush2.msra.mxu0 0.0
        %796 = vmatprep.subr.mxu0 0.0
        %797 = vmatpush2.msra.mxu0 0.0
        %798 = vmatprep.subr.mxu0 0.0
        %799 = vmatpush2.msra.mxu0 0.0
        %800 = vmatprep.subr.mxu0 0.0
        %801 = vmatpush2.msra.mxu0 0.0
        %802 = vmatprep.subr.mxu0 0.0
        %803 = vmatpush2.msra.mxu0 0.0
        %804 = vmatprep.subr.mxu0 0.0
        %805 = vmatpush2.msra.mxu0 0.0
        %806 = vmatprep.subr.mxu0 0.0
        %807 = vmatpush2.msra.mxu0 0.0
        %808 = vmatprep.subr.mxu0 0.0
        %809 = vmatpush2.msra.mxu0 0.0
        %810 = vmatprep.mubr.f32.mxu0 0.0
        %811 = vmatmul.mubr.f32.gmra.mxu0 %v715
        %v812 = vpop.f32.mrf.mxu0
        %v813 = vadd.f32 %v744, %v812
        %v814 = vpop.f32.mrf.mxu0
        %815 = vmatprep.mubr.f32.mxu0 0.0
        %816 = vmatmul.mubr.f32.gmra.mxu0 %v716
        %v817 = vpop.f32.mrf.mxu0
        %v818 = vadd.f32 %v744, %v817
        %v819 = vpop.f32.mrf.mxu0
        %820 = vmatprep.mubr.f32.mxu0 0.0
        %821 = vmatmul.mubr.f32.gmra.mxu0 %v717
        %v822 = vpop.f32.mrf.mxu0
        %v823 = vadd.f32 %v744, %v822
        %v824 = vpop.f32.mrf.mxu0
        %825 = vmatprep.mubr.f32.mxu0 0.0
        %826 = vmatmul.mubr.f32.gmra.mxu0 %v718
        %v827 = vpop.f32.mrf.mxu0
        %v828 = vadd.f32 %v744, %v827
        %v829 = vpop.f32.mrf.mxu0
        %830 = vmatprep.mubr.f32.mxu0 0.0
        %831 = vmatmul.mubr.f32.gmra.mxu0 %v719
        %v832 = vpop.f32.mrf.mxu0
        %v833 = vadd.f32 %v744, %v832
        %v834 = vpop.f32.mrf.mxu0
        %835 = vmatprep.mubr.f32.mxu0 0.0
        %836 = vmatmul.mubr.f32.gmra.mxu0 %v720
        %v837 = vpop.f32.mrf.mxu0
        %v838 = vadd.f32 %v744, %v837
        %v839 = vpop.f32.mrf.mxu0
        %840 = vmatprep.mubr.f32.mxu0 0.0
        %841 = vmatmul.mubr.f32.gmra.mxu0 %v721
        %v842 = vpop.f32.mrf.mxu0
        %v843 = vadd.f32 %v744, %v842
        %v844 = vpop.f32.mrf.mxu0
        %845 = vmatprep.mubr.f32.mxu0 0.0
        %846 = vmatmul.mubr.f32.gmra.mxu0 %v722
        %v847 = vpop.f32.mrf.mxu0
        %v848 = vadd.f32 %v744, %v847
        %v849 = vpop.f32.mrf.mxu0
        %850 = vdwg.mxu0
        %v851 = vmul.f32 %v813, 0.5
        %v852 = vmul.f32 %v818, 0.5
        %v853 = vmul.f32 %v823, 0.5
        %v854 = vmul.f32 %v828, 0.5
        %v855 = vmul.f32 %v833, 0.5
        %v856 = vmul.f32 %v838, 0.5
        %v857 = vmul.f32 %v843, 0.5
        %v858 = vmul.f32 %v848, 0.5
        %v859 = vmul.f32 %v813, 0.70710677
        %v860 = vmul.f32 %v818, 0.70710677
        %v861 = vmul.f32 %v823, 0.70710677
        %v862 = vmul.f32 %v828, 0.70710677
        %v863 = vmul.f32 %v833, 0.70710677
        %v864 = vmul.f32 %v838, 0.70710677
        %v865 = vmul.f32 %v843, 0.70710677
        %v866 = vmul.f32 %v848, 0.70710677
        %v867 = verf.f32.pop %v859
        %v868 = verf.f32.pop %v860
        %v869 = verf.f32.pop %v861
        %v870 = verf.f32.pop %v862
        %v871 = verf.f32.pop %v863
        %v872 = verf.f32.pop %v864
        %v873 = verf.f32.pop %v865
        %v874 = verf.f32.pop %v866
        %v875 = vadd.f32 %v867, 1.0
        %v876 = vadd.f32 %v868, 1.0
        %v877 = vadd.f32 %v869, 1.0
        %v878 = vadd.f32 %v870, 1.0
        %v879 = vadd.f32 %v871, 1.0
        %v880 = vadd.f32 %v872, 1.0
        %v881 = vadd.f32 %v873, 1.0
        %v882 = vadd.f32 %v874, 1.0
        %v883 = vmul.f32 %v851, %v875
        %v884 = vmul.f32 %v852, %v876
        %v885 = vmul.f32 %v853, %v877
        %v886 = vmul.f32 %v854, %v878
        %v887 = vmul.f32 %v855, %v879
        %v888 = vmul.f32 %v856, %v880
        %v889 = vmul.f32 %v857, %v881
        %v890 = vmul.f32 %v858, %v882
        %v891 = vld [vmem:[%s7] sm:$0xff]
        %v892 = vld [vmem:[%s7 + $0x8] sm:$0xff]
        %v893 = vld [vmem:[%s7 + $0x10] sm:$0xff]
        %v894 = vld [vmem:[%s7 + $0x18] sm:$0xff]
        %v895 = vld [vmem:[%s7 + $0x20] sm:$0xff]
        %v896 = vld [vmem:[%s7 + $0x28] sm:$0xff]
        %v897 = vld [vmem:[%s7 + $0x30] sm:$0xff]
        %v898 = vld [vmem:[%s7 + $0x38] sm:$0xff]
        %v899 = vld [vmem:[%s7 + $0x40] sm:$0xff]
        %v900 = vld [vmem:[%s7 + $0x48] sm:$0xff]
        %v901 = vld [vmem:[%s7 + $0x50] sm:$0xff]
        %v902 = vld [vmem:[%s7 + $0x58] sm:$0xff]
        %v903 = vld [vmem:[%s7 + $0x60] sm:$0xff]
        %v904 = vld [vmem:[%s7 + $0x68] sm:$0xff]
        %v905 = vld [vmem:[%s7 + $0x70] sm:$0xff]
        %v906 = vld [vmem:[%s7 + $0x78] sm:$0xff]
        %v907 = vld [vmem:[%s8] sm:$0x1]
        %v909 = vlaneseq
        %v910 = vshrl.u32 %v909, 7
        %v911 = vsub.s32 0, %v910
        %v912 = vrot.slane %v907, %v911
        %914 = vmatprep.subr.mxu0 0.0
        %915 = vmatpush1.msra.mxu0 %v906
        %916 = vmatprep.subr.mxu0 0.0
        %917 = vmatpush1.msra.mxu0 %v905
        %918 = vmatprep.subr.mxu0 0.0
        %919 = vmatpush1.msra.mxu0 %v904
        %920 = vmatprep.subr.mxu0 0.0
        %921 = vmatpush1.msra.mxu0 %v903
        %922 = vmatprep.subr.mxu0 0.0
        %923 = vmatpush1.msra.mxu0 %v902
        %924 = vmatprep.subr.mxu0 0.0
        %925 = vmatpush1.msra.mxu0 %v901
        %926 = vmatprep.subr.mxu0 0.0
        %927 = vmatpush1.msra.mxu0 %v900
        %928 = vmatprep.subr.mxu0 0.0
        %929 = vmatpush1.msra.mxu0 %v899
        %930 = vmatprep.subr.mxu0 0.0
        %931 = vmatpush1.msra.mxu0 %v898
        %932 = vmatprep.subr.mxu0 0.0
        %933 = vmatpush1.msra.mxu0 %v897
        %934 = vmatprep.subr.mxu0 0.0
        %935 = vmatpush1.msra.mxu0 %v896
        %936 = vmatprep.subr.mxu0 0.0
        %937 = vmatpush1.msra.mxu0 %v895
        %938 = vmatprep.subr.mxu0 0.0
        %939 = vmatpush1.msra.mxu0 %v894
        %940 = vmatprep.subr.mxu0 0.0
        %941 = vmatpush1.msra.mxu0 %v893
        %942 = vmatprep.subr.mxu0 0.0
        %943 = vmatpush1.msra.mxu0 %v892
        %944 = vmatprep.subr.mxu0 0.0
        %945 = vmatpush1.msra.mxu0 %v891
        %946 = vmatprep.subr.mxu0 0.0
        %947 = vmatpush2.msra.mxu0 0.0
        %948 = vmatprep.subr.mxu0 0.0
        %949 = vmatpush2.msra.mxu0 0.0
        %950 = vmatprep.subr.mxu0 0.0
        %951 = vmatpush2.msra.mxu0 0.0
        %952 = vmatprep.subr.mxu0 0.0
        %953 = vmatpush2.msra.mxu0 0.0
        %954 = vmatprep.subr.mxu0 0.0
        %955 = vmatpush2.msra.mxu0 0.0
        %956 = vmatprep.subr.mxu0 0.0
        %957 = vmatpush2.msra.mxu0 0.0
        %958 = vmatprep.subr.mxu0 0.0
        %959 = vmatpush2.msra.mxu0 0.0
        %960 = vmatprep.subr.mxu0 0.0
        %961 = vmatpush2.msra.mxu0 0.0
        %962 = vmatprep.subr.mxu0 0.0
        %963 = vmatpush2.msra.mxu0 0.0
        %964 = vmatprep.subr.mxu0 0.0
        %965 = vmatpush2.msra.mxu0 0.0
        %966 = vmatprep.subr.mxu0 0.0
        %967 = vmatpush2.msra.mxu0 0.0
        %968 = vmatprep.subr.mxu0 0.0
        %969 = vmatpush2.msra.mxu0 0.0
        %970 = vmatprep.subr.mxu0 0.0
        %971 = vmatpush2.msra.mxu0 0.0
        %972 = vmatprep.subr.mxu0 0.0
        %973 = vmatpush2.msra.mxu0 0.0
        %974 = vmatprep.subr.mxu0 0.0
        %975 = vmatpush2.msra.mxu0 0.0
        %976 = vmatprep.subr.mxu0 0.0
        %977 = vmatpush2.msra.mxu0 0.0
        %978 = vmatprep.mubr.f32.mxu0 0.0
        %979 = vmatmul.mubr.f32.gmra.mxu0 %v883
        %v980 = vpop.f32.mrf.mxu0
        %v981 = vadd.f32 %v912, %v980
        %v982 = vpop.f32.mrf.mxu0
        %983 = vmatprep.mubr.f32.mxu0 0.0
        %984 = vmatmul.mubr.f32.gmra.mxu0 %v884
        %v985 = vpop.f32.mrf.mxu0
        %v986 = vadd.f32 %v912, %v985
        %v987 = vpop.f32.mrf.mxu0
        %988 = vmatprep.mubr.f32.mxu0 0.0
        %989 = vmatmul.mubr.f32.gmra.mxu0 %v885
        %v990 = vpop.f32.mrf.mxu0
        %v991 = vadd.f32 %v912, %v990
        %v992 = vpop.f32.mrf.mxu0
        %993 = vmatprep.mubr.f32.mxu0 0.0
        %994 = vmatmul.mubr.f32.gmra.mxu0 %v886
        %v995 = vpop.f32.mrf.mxu0
        %v996 = vadd.f32 %v912, %v995
        %v997 = vpop.f32.mrf.mxu0
        %998 = vmatprep.mubr.f32.mxu0 0.0
        %999 = vmatmul.mubr.f32.gmra.mxu0 %v887
        %v1000 = vpop.f32.mrf.mxu0
        %v1001 = vadd.f32 %v912, %v1000
        %v1002 = vpop.f32.mrf.mxu0
        %1003 = vmatprep.mubr.f32.mxu0 0.0
        %1004 = vmatmul.mubr.f32.gmra.mxu0 %v888
        %v1005 = vpop.f32.mrf.mxu0
        %v1006 = vadd.f32 %v912, %v1005
        %v1007 = vpop.f32.mrf.mxu0
        %1008 = vmatprep.mubr.f32.mxu0 0.0
        %1009 = vmatmul.mubr.f32.gmra.mxu0 %v889
        %v1010 = vpop.f32.mrf.mxu0
        %v1011 = vadd.f32 %v912, %v1010
        %v1012 = vpop.f32.mrf.mxu0
        %1013 = vmatprep.mubr.f32.mxu0 0.0
        %1014 = vmatmul.mubr.f32.gmra.mxu0 %v890
        %v1015 = vpop.f32.mrf.mxu0
        %v1016 = vadd.f32 %v912, %v1015
        %v1017 = vpop.f32.mrf.mxu0
        %1018 = vdwg.mxu0
        %1019 = vst [vmem:[%s354] sm:$0xff] %v981
        %1020 = vst [vmem:[%s354 + $0x8] sm:$0xff] %v986
        %1021 = vst [vmem:[%s354 + $0x10] sm:$0xff] %v991
        %1022 = vst [vmem:[%s354 + $0x18] sm:$0xff] %v996
        %1023 = vst [vmem:[%s354 + $0x20] sm:$0xff] %v1001
        %1024 = vst [vmem:[%s354 + $0x28] sm:$0xff] %v1006
        %1025 = vst [vmem:[%s354 + $0x30] sm:$0xff] %v1011
        %1026 = vst [vmem:[%s354 + $0x38] sm:$0xff] %v1016
        %s1027 = sand.u32 %s227, 1
        %s1028 = scalar_lea.sflag [#allocation4], %s1027
        %s1029 = sand.u32 %s227, 1
        %s1030 = smul.addr %s1029, 64
        %s1031 = scalar_lea.vmem [#allocation7], %s1030
        // Predicated region
        $region65: #{tpu_custom_call.1} parent=55 // pred_check
          %p1032 = pneg %p237
        $region66: #{tpu_custom_call.1} parent=55 // pred_check_branch
          %1034 = sbr.rel (%p1032) target = $region68
        $region67: #{tpu_custom_call.1} parent=55 // pred_region
          %s1035 = smul.u32 8, %s25
          %s1037 = ssub.s32 1024, 1024
          %1038 = vsyncadd %s1028, %s1037
          %s1039 = smul.addr %s1035, 128
          %s1040 = scalar_lea.hbm %s9, %s1039
          %s1041 = sshll.u32 %s1031, 4
          %s1042 = int_to_ptr.vmem [resolvable:$true] %s1041
          %1047 = dma.vmem_to_hbm [thread:$0]  %s1042, 1024, %s1040, %s1028, 128, 128, 8
        $region68: #{tpu_custom_call.1} parent=55 // pred_fallthru
          _
      $region56: #{tpu_custom_call.1} parent=5 // pred_fallthru
        _
      %p1048 = scmp.le.s32.totalorder 2, %s20
      // Predicated region
      $region69: #{tpu_custom_call.1} parent=5 // pred_check
        %p1049 = pneg %p1048
      $region70: #{tpu_custom_call.1} parent=5 // pred_check_branch
        %1051 = sbr.rel (%p1049) target = $region72
      $region71: #{tpu_custom_call.1} parent=5 // pred_region
        %s1052 = ssub.s32 %s20, 2
        // Predicated region
        $region73: #{tpu_custom_call.1} parent=71 // pred_check
          %p1053 = pneg %p243
        $region74: #{tpu_custom_call.1} parent=71 // pred_check_branch
          %1055 = sbr.rel (%p1053) target = $region76
        $region75: #{tpu_custom_call.1} parent=71 // pred_region
          %s1056 = sand.u32 %s228, 1
          %s1057 = scalar_lea.sflag [#allocation4], %s1056
          %s1058 = sand.u32 %s228, 1
          %s1059 = smul.addr %s1058, 64
          %s1060 = scalar_lea.vmem [#allocation7], %s1059
          %1061 = dma.done %s1057, 1024
        $region76: #{tpu_custom_call.1} parent=71 // pred_fallthru
          _
      $region72: #{tpu_custom_call.1} parent=5 // pred_fallthru
        _
    $region6: #{tpu_custom_call.1} parent=1 // loop_footer
      %s24 = sadd.s32 1, %s20
    $region7: #{tpu_custom_call.1} parent=1 // loop_footer_branch
      %19 = sbr.rel target = $region3
    $region8: #{tpu_custom_call.1} parent=1 // loop_exit
      _
    %1062 = vsyncpa [#allocation3], 1
    %s1063 = scalar_lea.sflag [#allocation3], 1
    %1064 = vsyncpa %s1063, 1
    %1065 = vsyncpa [#allocation6], 1
    %1066 = vsyncpa [#allocation4], 1
    %s1067 = scalar_lea.sflag [#allocation4], 1
    %1068 = vsyncpa %s1067, 1

</llo_original>
